<compile_context>
chip_gen: v5e
topology: v5e:2x2
jax: 0.10.0
libtpu: 0.0.40
codegen_flags: <defaults>
</compile_context>

<pallas_src>
import jax
import jax.numpy as jnp
from jax.experimental import pallas as pl
from jax.experimental.pallas import tpu as pltpu

LN_EPS = 1e-5
OUT_PAD = 128  # lane-dense output width


def actor_kernel(obs_ref, w0_ref, b0_ref, g_ref, beta_ref,
                 w1_ref, b1_ref, w2_ref, b2_ref, mu_ref):
    x = obs_ref[...].astype(jnp.float32)

    # --- LayerNormMLP front: Linear -> LayerNorm -> Tanh ---
    h = jnp.dot(x, w0_ref[...], preferred_element_type=jnp.float32) + b0_ref[...]
    mean = jnp.mean(h, axis=-1, keepdims=True)
    # One-pass variance: E[h^2] - mean^2 (saves a subtract/square pass + reduce).
    var = jnp.maximum(jnp.mean(h * h, axis=-1, keepdims=True) - mean * mean, 0.0)
    h = (h - mean) * jax.lax.rsqrt(var + LN_EPS) * g_ref[...] + beta_ref[...]
    h = jnp.tanh(h)

    # --- MLP hidden: Linear -> ReLU ---
    h = jnp.dot(h, w1_ref[...], preferred_element_type=jnp.float32) + b1_ref[...]
    h = jnp.maximum(h, 0.0)

    # --- output Linear (padded to 128 lanes) + tanh head ---
    mu = jnp.dot(h, w2_ref[...], preferred_element_type=jnp.float32) + b2_ref[...]
    mu_ref[...] = jnp.tanh(mu).astype(mu_ref.dtype)


def init_params(key, obs_dim, action_dim, hidden_dims):
    """Deterministic synthetic parameters (weights already transposed to (in, out))."""
    h0, h1 = hidden_dims
    ks = jax.random.split(key, 6)
    scale = 0.1
    return {
        "w0": scale * jax.random.normal(ks[0], (obs_dim, h0), jnp.float32),
        "b0": scale * jax.random.normal(ks[1], (1, h0), jnp.float32),
        "ln_g": jnp.ones((1, h0), jnp.float32),
        "ln_b": jnp.zeros((1, h0), jnp.float32),
        "w1": scale * jax.random.normal(ks[2], (h0, h1), jnp.float32),
        "b1": scale * jax.random.normal(ks[3], (1, h1), jnp.float32),
        "w2": scale * jax.random.normal(ks[4], (h1, action_dim), jnp.float32),
        "b2": scale * jax.random.normal(ks[5], (1, action_dim), jnp.float32),
    }


def deterministic_actor_forward(obs, std, params, block_b=512):
    B, obs_dim = obs.shape
    h0 = params["w0"].shape[1]
    h1 = params["w1"].shape[1]
    action_dim = params["w2"].shape[1]

    # Zero-pad the output projection to a lane-dense 128-wide slab (unmasked stores).
    w2p = jnp.zeros((h1, OUT_PAD), jnp.float32).at[:, :action_dim].set(params["w2"])
    b2p = jnp.zeros((1, OUT_PAD), jnp.float32).at[:, :action_dim].set(params["b2"])

    # Batch tile: multiple of 8 sublanes; pad the batch so the grid divides evenly.
    TB = min(block_b, max(8, ((B + 7) // 8) * 8))
    Bp = pl.cdiv(B, TB) * TB
    obs_p = obs if Bp == B else jnp.pad(obs, ((0, Bp - B), (0, 0)))
    grid = (Bp // TB,)

    def param_spec(shape):
        # Whole parameter, same block every grid step -> stays VMEM-resident.
        return pl.BlockSpec(shape, lambda i: (0, 0))

    mu = pl.pallas_call(
        actor_kernel,
        out_shape=jax.ShapeDtypeStruct((Bp, OUT_PAD), jnp.float32),
        grid=grid,
        in_specs=[
            pl.BlockSpec((TB, obs_dim), lambda i: (i, 0)),   # obs: streamed by batch tile
            param_spec((obs_dim, h0)),                        # w0
            param_spec((1, h0)),                              # b0
            param_spec((1, h0)),                              # ln gamma
            param_spec((1, h0)),                              # ln beta
            param_spec((h0, h1)),                             # w1
            param_spec((1, h1)),                              # b1
            param_spec((h1, OUT_PAD)),                        # w2 (lane-padded)
            param_spec((1, OUT_PAD)),                         # b2 (lane-padded)
        ],
        out_specs=pl.BlockSpec((TB, OUT_PAD), lambda i: (i, 0)),
        compiler_params=pltpu.CompilerParams(
            dimension_semantics=("parallel",)),               # 2 TCs on v7x
    )(
        obs_p,
        params["w0"], params["b0"], params["ln_g"], params["ln_b"],
        params["w1"], params["b1"], w2p, b2p,
    )

    mu = mu[:B, :action_dim]
    # std is a constant broadcast of a scalar -> build it outside the kernel.
    std_out = jnp.full_like(mu, std)
    return mu, std_out


def reference_forward(obs, std, params):
    h = obs @ params["w0"] + params["b0"]
    mean = h.mean(-1, keepdims=True)
    var = ((h - mean) ** 2).mean(-1, keepdims=True)
    h = (h - mean) / jnp.sqrt(var + LN_EPS) * params["ln_g"] + params["ln_b"]
    h = jnp.tanh(h)
    h = jnp.maximum(h @ params["w1"] + params["b1"], 0.0)
    mu = jnp.tanh(h @ params["w2"] + params["b2"])
    return mu, jnp.ones_like(mu) * std


if __name__ == "__main__":
    obs_dim, action_dim = 24, 6
    hidden_dims = (32, 32)   # spectral_norms = (False, False)
    batch = 4
    std = 0.2

    key = jax.random.PRNGKey(0)
    pkey, okey = jax.random.split(key)
    params = init_params(pkey, obs_dim, action_dim, hidden_dims)
    obs = jax.random.normal(okey, (batch, obs_dim), jnp.float32)

    mu, std_out = deterministic_actor_forward(obs, std, params)
    jax.block_until_ready((mu, std_out))

    mu_ref, std_ref = reference_forward(obs, std, params)
    assert mu.shape == (batch, action_dim)
    assert jnp.allclose(mu, mu_ref, atol=1e-5, rtol=1e-5), "mu mismatch"
    assert jnp.allclose(std_out, std_ref, atol=1e-6), "std mismatch"

    print("KERNEL_OK")
</pallas_src>

<mosaic_0001>
module attributes {stable_mosaic.version = 11 : i64} {
  func.func @actor_kernel(%arg0: i32, %arg1: memref<8x24xf32, #tpu.memory_space<vmem>>, %arg2: memref<24x32xf32, #tpu.memory_space<vmem>>, %arg3: memref<1x32xf32, #tpu.memory_space<vmem>>, %arg4: memref<1x32xf32, #tpu.memory_space<vmem>>, %arg5: memref<1x32xf32, #tpu.memory_space<vmem>>, %arg6: memref<32x32xf32, #tpu.memory_space<vmem>>, %arg7: memref<1x32xf32, #tpu.memory_space<vmem>>, %arg8: memref<32x128xf32, #tpu.memory_space<vmem>>, %arg9: memref<1x128xf32, #tpu.memory_space<vmem>>, %arg10: memref<8x128xf32, #tpu.memory_space<vmem>>) attributes {dimension_semantics = [#tpu.dimension_semantics<parallel>], iteration_bounds = array<i64: 1>, scalar_prefetch = 0 : i64, scratch_operands = 0 : i64, tpu.core_type = #tpu.core_type<tc>, window_params = [{transform_indices = @transform_0, window_bounds = array<i64: 8, 24>}, {pipeline_mode = #tpu.pipeline_mode<synchronous>, transform_indices = @transform_1, window_bounds = array<i64: 24, 32>}, {pipeline_mode = #tpu.pipeline_mode<synchronous>, transform_indices = @transform_2, window_bounds = array<i64: 1, 32>}, {pipeline_mode = #tpu.pipeline_mode<synchronous>, transform_indices = @transform_3, window_bounds = array<i64: 1, 32>}, {pipeline_mode = #tpu.pipeline_mode<synchronous>, transform_indices = @transform_4, window_bounds = array<i64: 1, 32>}, {pipeline_mode = #tpu.pipeline_mode<synchronous>, transform_indices = @transform_5, window_bounds = array<i64: 32, 32>}, {pipeline_mode = #tpu.pipeline_mode<synchronous>, transform_indices = @transform_6, window_bounds = array<i64: 1, 32>}, {pipeline_mode = #tpu.pipeline_mode<synchronous>, transform_indices = @transform_7, window_bounds = array<i64: 32, 128>}, {pipeline_mode = #tpu.pipeline_mode<synchronous>, transform_indices = @transform_8, window_bounds = array<i64: 1, 128>}, {transform_indices = @transform_9, window_bounds = array<i64: 8, 128>}]} {
    %c0 = arith.constant 0 : index
    %c0_0 = arith.constant 0 : index
    %0 = vector.load %arg1[%c0, %c0_0] : memref<8x24xf32, #tpu.memory_space<vmem>>, vector<8x24xf32>
    %c0_1 = arith.constant 0 : index
    %c0_2 = arith.constant 0 : index
    %1 = vector.load %arg2[%c0_1, %c0_2] : memref<24x32xf32, #tpu.memory_space<vmem>>, vector<24x32xf32>
    %cst = arith.constant dense<0.000000e+00> : vector<8x32xf32>
    %2 = tpu.matmul %0, %1, %cst {dimension_numbers = #tpu.dot_dimension_numbers<[1], [0], [0], [1], [0, 0, 1, 1], [], []>} : vector<8x24xf32>, vector<24x32xf32>, vector<8x32xf32> -> vector<8x32xf32>
    %c0_3 = arith.constant 0 : index
    %c0_4 = arith.constant 0 : index
    %3 = vector.load %arg3[%c0_3, %c0_4] : memref<1x32xf32, #tpu.memory_space<vmem>>, vector<1x32xf32>
    %4 = vector.broadcast %3 : vector<1x32xf32> to vector<8x32xf32>
    %5 = arith.addf %2, %4 : vector<8x32xf32>
    %cst_5 = arith.constant dense<0.000000e+00> : vector<8xf32>
    %6 = vector.multi_reduction <add>, %5, %cst_5 [1] : vector<8x32xf32> to vector<8xf32>
    %7 = vector.shape_cast %6 : vector<8xf32> to vector<8x1xf32>
    %cst_6 = arith.constant 3.200000e+01 : f32
    %8 = vector.broadcast %cst_6 : f32 to vector<8x1xf32>
    %9 = arith.divf %7, %8 : vector<8x1xf32>
    %10 = arith.mulf %5, %5 : vector<8x32xf32>
    %cst_7 = arith.constant dense<0.000000e+00> : vector<8xf32>
    %11 = vector.multi_reduction <add>, %10, %cst_7 [1] : vector<8x32xf32> to vector<8xf32>
    %12 = vector.shape_cast %11 : vector<8xf32> to vector<8x1xf32>
    %cst_8 = arith.constant 3.200000e+01 : f32
    %13 = vector.broadcast %cst_8 : f32 to vector<8x1xf32>
    %14 = arith.divf %12, %13 : vector<8x1xf32>
    %15 = arith.mulf %9, %9 : vector<8x1xf32>
    %16 = arith.subf %14, %15 : vector<8x1xf32>
    %cst_9 = arith.constant 0.000000e+00 : f32
    %17 = vector.broadcast %cst_9 : f32 to vector<8x1xf32>
    %18 = arith.maximumf %16, %17 : vector<8x1xf32>
    %19 = vector.broadcast %9 : vector<8x1xf32> to vector<8x32xf32>
    %20 = arith.subf %5, %19 : vector<8x32xf32>
    %cst_10 = arith.constant 9.99999974E-6 : f32
    %21 = vector.broadcast %cst_10 : f32 to vector<8x1xf32>
    %22 = arith.addf %18, %21 : vector<8x1xf32>
    %23 = math.rsqrt %22 : vector<8x1xf32>
    %24 = vector.broadcast %23 : vector<8x1xf32> to vector<8x32xf32>
    %25 = arith.mulf %20, %24 : vector<8x32xf32>
    %c0_11 = arith.constant 0 : index
    %c0_12 = arith.constant 0 : index
    %26 = vector.load %arg4[%c0_11, %c0_12] : memref<1x32xf32, #tpu.memory_space<vmem>>, vector<1x32xf32>
    %27 = vector.broadcast %26 : vector<1x32xf32> to vector<8x32xf32>
    %28 = arith.mulf %25, %27 : vector<8x32xf32>
    %c0_13 = arith.constant 0 : index
    %c0_14 = arith.constant 0 : index
    %29 = vector.load %arg5[%c0_13, %c0_14] : memref<1x32xf32, #tpu.memory_space<vmem>>, vector<1x32xf32>
    %30 = vector.broadcast %29 : vector<1x32xf32> to vector<8x32xf32>
    %31 = arith.addf %28, %30 : vector<8x32xf32>
    %32 = math.tanh %31 : vector<8x32xf32>
    %c0_15 = arith.constant 0 : index
    %c0_16 = arith.constant 0 : index
    %33 = vector.load %arg6[%c0_15, %c0_16] : memref<32x32xf32, #tpu.memory_space<vmem>>, vector<32x32xf32>
    %cst_17 = arith.constant dense<0.000000e+00> : vector<8x32xf32>
    %34 = tpu.matmul %32, %33, %cst_17 {dimension_numbers = #tpu.dot_dimension_numbers<[1], [0], [0], [1], [0, 0, 1, 1], [], []>} : vector<8x32xf32>, vector<32x32xf32>, vector<8x32xf32> -> vector<8x32xf32>
    %c0_18 = arith.constant 0 : index
    %c0_19 = arith.constant 0 : index
    %35 = vector.load %arg7[%c0_18, %c0_19] : memref<1x32xf32, #tpu.memory_space<vmem>>, vector<1x32xf32>
    %36 = vector.broadcast %35 : vector<1x32xf32> to vector<8x32xf32>
    %37 = arith.addf %34, %36 : vector<8x32xf32>
    %cst_20 = arith.constant 0.000000e+00 : f32
    %38 = vector.broadcast %cst_20 : f32 to vector<8x32xf32>
    %39 = arith.maximumf %37, %38 : vector<8x32xf32>
    %c0_21 = arith.constant 0 : index
    %c0_22 = arith.constant 0 : index
    %40 = vector.load %arg8[%c0_21, %c0_22] : memref<32x128xf32, #tpu.memory_space<vmem>>, vector<32x128xf32>
    %cst_23 = arith.constant dense<0.000000e+00> : vector<8x128xf32>
    %41 = tpu.matmul %39, %40, %cst_23 {dimension_numbers = #tpu.dot_dimension_numbers<[1], [0], [0], [1], [0, 0, 1, 1], [], []>} : vector<8x32xf32>, vector<32x128xf32>, vector<8x128xf32> -> vector<8x128xf32>
    %c0_24 = arith.constant 0 : index
    %c0_25 = arith.constant 0 : index
    %42 = vector.load %arg9[%c0_24, %c0_25] : memref<1x128xf32, #tpu.memory_space<vmem>>, vector<1x128xf32>
    %43 = vector.broadcast %42 : vector<1x128xf32> to vector<8x128xf32>
    %44 = arith.addf %41, %43 : vector<8x128xf32>
    %45 = math.tanh %44 : vector<8x128xf32>
    %c0_26 = arith.constant 0 : index
    %c0_27 = arith.constant 0 : index
    %46 = vector.load %arg10[%c0_26, %c0_27] : memref<8x128xf32, #tpu.memory_space<vmem>>, vector<8x128xf32>
    tpu.vector_store %arg10[%c0_26, %c0_27], %45 {strides = array<i32>} : memref<8x128xf32, #tpu.memory_space<vmem>>, vector<8x128xf32>,
    return
  }
  func.func @transform_0(%arg0: i32) -> (i32, i32) {
    %c0_i32 = arith.constant 0 : i32
    %c0_i32_0 = arith.constant 0 : i32
    return %arg0, %c0_i32 : i32, i32
  }
  func.func @transform_1(%arg0: i32) -> (i32, i32) {
    %c0_i32 = arith.constant 0 : i32
    %c0_i32_0 = arith.constant 0 : i32
    %c0_i32_1 = arith.constant 0 : i32
    return %c0_i32, %c0_i32_0 : i32, i32
  }
  func.func @transform_2(%arg0: i32) -> (i32, i32) {
    %c0_i32 = arith.constant 0 : i32
    %c0_i32_0 = arith.constant 0 : i32
    %c0_i32_1 = arith.constant 0 : i32
    return %c0_i32, %c0_i32_0 : i32, i32
  }
  func.func @transform_3(%arg0: i32) -> (i32, i32) {
    %c0_i32 = arith.constant 0 : i32
    %c0_i32_0 = arith.constant 0 : i32
    %c0_i32_1 = arith.constant 0 : i32
    return %c0_i32, %c0_i32_0 : i32, i32
  }
  func.func @transform_4(%arg0: i32) -> (i32, i32) {
    %c0_i32 = arith.constant 0 : i32
    %c0_i32_0 = arith.constant 0 : i32
    %c0_i32_1 = arith.constant 0 : i32
    return %c0_i32, %c0_i32_0 : i32, i32
  }
  func.func @transform_5(%arg0: i32) -> (i32, i32) {
    %c0_i32 = arith.constant 0 : i32
    %c0_i32_0 = arith.constant 0 : i32
    %c0_i32_1 = arith.constant 0 : i32
    return %c0_i32, %c0_i32_0 : i32, i32
  }
  func.func @transform_6(%arg0: i32) -> (i32, i32) {
    %c0_i32 = arith.constant 0 : i32
    %c0_i32_0 = arith.constant 0 : i32
    %c0_i32_1 = arith.constant 0 : i32
    return %c0_i32, %c0_i32_0 : i32, i32
  }
  func.func @transform_7(%arg0: i32) -> (i32, i32) {
    %c0_i32 = arith.constant 0 : i32
    %c0_i32_0 = arith.constant 0 : i32
    %c0_i32_1 = arith.constant 0 : i32
    return %c0_i32, %c0_i32_0 : i32, i32
  }
  func.func @transform_8(%arg0: i32) -> (i32, i32) {
    %c0_i32 = arith.constant 0 : i32
    %c0_i32_0 = arith.constant 0 : i32
    %c0_i32_1 = arith.constant 0 : i32
    return %c0_i32, %c0_i32_0 : i32, i32
  }
  func.func @transform_9(%arg0: i32) -> (i32, i32) {
    %c0_i32 = arith.constant 0 : i32
    %c0_i32_0 = arith.constant 0 : i32
    return %arg0, %c0_i32 : i32, i32
  }
}

</mosaic_0001>

<llo_original>
// kernel: tpu_custom_call.1
$region0: #{tpu_custom_call.1}
  #allocation0 [shape = 'u32[]', space=smem, size = 0x4, offset = 0x4, fixed_abs, tag = 'smem constant byte address 0x4 - core index']
  #allocation1 [shape = 'u32[72,128]{1,0:T(1,128)}', space=vmem, size = 0x9000, scoped, tag = 'internal scratch']
  %s0 = inlined_call_operand.hbm [shape: f32[8,24], index: 0, kind: input, shape index: {}]
  %s1 = inlined_call_operand.hbm [shape: f32[24,32], index: 1, kind: input, shape index: {}]
  %s2 = inlined_call_operand.vmem [shape: f32[1,32], index: 2, kind: input, shape index: {}]
  %s3 = inlined_call_operand.vmem [shape: f32[1,32], index: 3, kind: input, shape index: {}]
  %s4 = inlined_call_operand.vmem [shape: f32[1,32], index: 4, kind: input, shape index: {}]
  %s5 = inlined_call_operand.hbm [shape: f32[32,32], index: 5, kind: input, shape index: {}]
  %s6 = inlined_call_operand.vmem [shape: f32[1,32], index: 6, kind: input, shape index: {}]
  %s7 = inlined_call_operand.hbm [shape: f32[32,128], index: 7, kind: input, shape index: {}]
  %s8 = inlined_call_operand.vmem [shape: f32[1,128], index: 8, kind: input, shape index: {}]
  %s9 = inlined_call_operand.hbm [shape: f32[8,128], index: 9, kind: output, shape index: {}]
  %s10 = sld [smem:[#allocation0]]
  $region62: #{tpu_custom_call.1} parent=0
    _
  %s12 = ssub.s32 1, %s10
  %s13 = scalar_select 0, %s12, %s10
  $region1: #{tpu_custom_call.1} parent=0
    #allocation2 [shape = 'u8[4096]{0}', space=vmem, size = 0x1000, scoped, tag = 'input window, operand 0, single buffered']
    #allocation3 [shape = 's32[1]{0}', space=sflag, size = 0x4, scoped, tag = 'scoped memory for tpu_custom_call.1']
    #allocation4 [shape = 's32[1]{0}', space=sflag, size = 0x4, scoped, tag = 'scoped memory for tpu_custom_call.1']
    #allocation5 [shape = 'u8[12288]{0}', space=vmem, size = 0x3000, scoped, tag = 'input window, operand 1, single buffered']
    #allocation6 [shape = 's32[1]{0}', space=sflag, size = 0x4, scoped, tag = 'scoped memory for tpu_custom_call.1']
    #allocation7 [shape = 'u8[16384]{0}', space=vmem, size = 0x4000, scoped, tag = 'input window, operand 5, single buffered']
    #allocation8 [shape = 'u8[16384]{0}', space=vmem, size = 0x4000, scoped, tag = 'input window, operand 7, single buffered']
    #allocation9 [shape = 's32[1]{0}', space=sflag, size = 0x4, scoped, tag = 'scoped memory for tpu_custom_call.1']
    #allocation10 [shape = 'u8[4096]{0}', space=vmem, size = 0x1000, scoped, tag = 'output window, operand 0, single buffered']
    %14 = vsyncpa [#allocation3], 0
    %15 = vsyncpa [#allocation6], 0
    %16 = vsyncpa [#allocation9], 0
    %17 = vsyncpa [#allocation4], 0
    // Predicated region
    $region2: #{tpu_custom_call.1} parent=1 // pred_check
      _
    $region3: #{tpu_custom_call.1} parent=1 // pred_check_branch
      %19 = sbr.rel (0) target = $region5
    $region4: #{tpu_custom_call.1} parent=1 // pred_region
      %21 = vsyncadd [#allocation3], 0
      %s23 = sshll.u32 %s0, 4
      %s24 = int_to_ptr.hbm [resolvable:$true] %s23
      %s25 = sshll.u32 [#allocation2], 4
      %s26 = int_to_ptr.vmem [resolvable:$true] %s25
      %28 = dma.hbm_to_vmem [thread:$0]  %s24, 128, %s26, [#allocation3]
    $region5: #{tpu_custom_call.1} parent=1 // pred_fallthru
      _
    // Predicated region
    $region6: #{tpu_custom_call.1} parent=1 // pred_check
      _
    $region7: #{tpu_custom_call.1} parent=1 // pred_check_branch
      %30 = sbr.rel (0) target = $region9
    $region8: #{tpu_custom_call.1} parent=1 // pred_region
      %32 = vsyncadd [#allocation6], 0
      %s33 = sshll.u32 %s1, 4
      %s34 = int_to_ptr.hbm [resolvable:$true] %s33
      %s35 = sshll.u32 [#allocation5], 4
      %s36 = int_to_ptr.vmem [resolvable:$true] %s35
      %41 = dma.hbm_to_vmem [thread:$0]  %s34, 384, %s36, [#allocation6], 128, 128, 8
    $region9: #{tpu_custom_call.1} parent=1 // pred_fallthru
      _
    // Predicated region
    $region10: #{tpu_custom_call.1} parent=1 // pred_check
      _
    $region11: #{tpu_custom_call.1} parent=1 // pred_check_branch
      %43 = sbr.rel (0) target = $region13
    $region12: #{tpu_custom_call.1} parent=1 // pred_region
      _
    $region13: #{tpu_custom_call.1} parent=1 // pred_fallthru
      _
    // Predicated region
    $region14: #{tpu_custom_call.1} parent=1 // pred_check
      _
    $region15: #{tpu_custom_call.1} parent=1 // pred_check_branch
      %45 = sbr.rel (0) target = $region17
    $region16: #{tpu_custom_call.1} parent=1 // pred_region
      _
    $region17: #{tpu_custom_call.1} parent=1 // pred_fallthru
      _
    // Predicated region
    $region18: #{tpu_custom_call.1} parent=1 // pred_check
      _
    $region19: #{tpu_custom_call.1} parent=1 // pred_check_branch
      %47 = sbr.rel (0) target = $region21
    $region20: #{tpu_custom_call.1} parent=1 // pred_region
      _
    $region21: #{tpu_custom_call.1} parent=1 // pred_fallthru
      _
    // Predicated region
    $region22: #{tpu_custom_call.1} parent=1 // pred_check
      _
    $region23: #{tpu_custom_call.1} parent=1 // pred_check_branch
      %49 = sbr.rel (0) target = $region25
    $region24: #{tpu_custom_call.1} parent=1 // pred_region
      %51 = vsyncadd [#allocation6], 0
      %s52 = sshll.u32 %s5, 4
      %s53 = int_to_ptr.hbm [resolvable:$true] %s52
      %s54 = sshll.u32 [#allocation7], 4
      %s55 = int_to_ptr.vmem [resolvable:$true] %s54
      %60 = dma.hbm_to_vmem [thread:$0]  %s53, 512, %s55, [#allocation6], 128, 128, 8
    $region25: #{tpu_custom_call.1} parent=1 // pred_fallthru
      _
    // Predicated region
    $region26: #{tpu_custom_call.1} parent=1 // pred_check
      _
    $region27: #{tpu_custom_call.1} parent=1 // pred_check_branch
      %62 = sbr.rel (0) target = $region29
    $region28: #{tpu_custom_call.1} parent=1 // pred_region
      _
    $region29: #{tpu_custom_call.1} parent=1 // pred_fallthru
      _
    // Predicated region
    $region30: #{tpu_custom_call.1} parent=1 // pred_check
      _
    $region31: #{tpu_custom_call.1} parent=1 // pred_check_branch
      %64 = sbr.rel (0) target = $region33
    $region32: #{tpu_custom_call.1} parent=1 // pred_region
      %66 = vsyncadd [#allocation9], 0
      %s67 = sshll.u32 %s7, 4
      %s68 = int_to_ptr.hbm [resolvable:$true] %s67
      %s69 = sshll.u32 [#allocation8], 4
      %s70 = int_to_ptr.vmem [resolvable:$true] %s69
      %75 = dma.hbm_to_vmem [thread:$0]  %s68, 512, %s70, [#allocation9], 128, 128, 8
    $region33: #{tpu_custom_call.1} parent=1 // pred_fallthru
      _
    // Predicated region
    $region34: #{tpu_custom_call.1} parent=1 // pred_check
      _
    $region35: #{tpu_custom_call.1} parent=1 // pred_check_branch
      %77 = sbr.rel (0) target = $region37
    $region36: #{tpu_custom_call.1} parent=1 // pred_region
      _
    $region37: #{tpu_custom_call.1} parent=1 // pred_fallthru
      _
    // Predicated region
    $region38: #{tpu_custom_call.1} parent=1 // pred_check
      _
    $region39: #{tpu_custom_call.1} parent=1 // pred_check_branch
      %79 = sbr.rel (0) target = $region41
    $region40: #{tpu_custom_call.1} parent=1 // pred_region
      %81 = dma.done [#allocation3], 128
    $region41: #{tpu_custom_call.1} parent=1 // pred_fallthru
      _
    // Predicated region
    $region42: #{tpu_custom_call.1} parent=1 // pred_check
      _
    $region43: #{tpu_custom_call.1} parent=1 // pred_check_branch
      %83 = sbr.rel (0) target = $region45
    $region44: #{tpu_custom_call.1} parent=1 // pred_region
      %85 = dma.done [#allocation6], 384
    $region45: #{tpu_custom_call.1} parent=1 // pred_fallthru
      _
    // Predicated region
    $region46: #{tpu_custom_call.1} parent=1 // pred_check
      _
    $region47: #{tpu_custom_call.1} parent=1 // pred_check_branch
      %87 = sbr.rel (0) target = $region49
    $region48: #{tpu_custom_call.1} parent=1 // pred_region
      %89 = dma.done [#allocation6], 512
    $region49: #{tpu_custom_call.1} parent=1 // pred_fallthru
      _
    // Predicated region
    $region50: #{tpu_custom_call.1} parent=1 // pred_check
      _
    $region51: #{tpu_custom_call.1} parent=1 // pred_check_branch
      %91 = sbr.rel (0) target = $region53
    $region52: #{tpu_custom_call.1} parent=1 // pred_region
      %93 = dma.done [#allocation9], 512
    $region53: #{tpu_custom_call.1} parent=1 // pred_fallthru
      _
    %v94 = vld [vmem:[#allocation2] sm:$0xff]
    %v95 = vld [vmem:[#allocation5] sm:$0xff]
    %v96 = vld [vmem:[#allocation5 + $0x8] sm:$0xff]
    %v97 = vld [vmem:[#allocation5 + $0x10] sm:$0xff]
    %v98 = vld [vmem:[%s2] sm:$0x1]
    %v100 = vperm.slane %v98, 0
    %vm102 = vcmask 195584
    %v104 = vsel %vm102, %v94, 0
    %106 = vmatpush.msra.mxu0 0.0
    %107 = vmatpush.msra.mxu0 0.0
    %108 = vmatpush.msra.mxu0 0.0
    %109 = vmatpush.msra.mxu0 0.0
    %110 = vmatpush.msra.mxu0 0.0
    %111 = vmatpush.msra.mxu0 0.0
    %112 = vmatpush.msra.mxu0 0.0
    %113 = vmatpush.msra.mxu0 0.0
    %114 = vmatpush.msra.mxu0 0.0
    %115 = vmatpush.msra.mxu0 0.0
    %116 = vmatpush.msra.mxu0 0.0
    %117 = vmatpush.msra.mxu0 0.0
    %118 = vmatpush.msra.mxu0 0.0
    %119 = vmatpush.msra.mxu0 %v97
    %120 = vmatpush.msra.mxu0 %v96
    %121 = vmatpush.msra.mxu0 %v95
    %122 = vmatmul.f32.gmra.mxu0 %v104
    %v123 = vpop.f32.mrf.mxu0
    %v124 = vadd.f32 %v100, %v123
    %125 = vdwg.mxu0
    %vm126 = vcmask 261120
    %v127 = vsel %vm126, %v124, 0.0
    %128 = vadd.xlane.f32.xlu0 %v127
    %v129 = vpop.xlane.xlu0 %128
    %v130 = vrcp.pop 32.0
    %v131 = vmul.f32 32.0, %v130
    %v132 = vsub.f32 1.0, %v131
    %v133 = vmul.f32 %v130, %v132
    %v134 = vadd.f32 %v130, %v133
    %vm135 = vweird.f32 %v130
    %v136 = vsel %vm135, %v130, %v134
    %v137 = vmul.f32 %v129, %v136
    %v138 = vmul.f32 %v124, %v124
    %v139 = vsel %vm126, %v138, 0.0
    %140 = vadd.xlane.f32.xlu0 %v139
    %v141 = vpop.xlane.xlu0 %140
    %v142 = vmul.f32 %v141, %v136
    %v143 = vmul.f32 %v137, %v137
    %v144 = vsub.f32 %v142, %v143
    %v145 = vmax.f32 %v144, 0.0
    %v146 = vsub.f32 %v124, %v137
    %v147 = vadd.f32 %v145, 1e-05
    %v148 = vrsqrt.pop %v147
    %v149 = vmul.f32 %v148, %v147
    %v150 = vmul.f32 %v149, %v148
    %v151 = vmul.f32 0.5, %v150
    %v152 = vsub.f32 1.5, %v151
    %v153 = vmul.f32 %v148, %v152
    %vm154 = vweird.f32 %v147
    %vm155 = vweird.f32 %v148
    %vm156 = vmor %vm154, %vm155
    %v157 = vsel %vm156, %v148, %v153
    %v158 = vmul.f32 %v146, %v157
    %v159 = vld [vmem:[%s3] sm:$0x1]
    %v161 = vperm.slane %v159, 0
    %v163 = vmul.f32 %v158, %v161
    %v164 = vld [vmem:[%s4] sm:$0x1]
    %v166 = vperm.slane %v164, 0
    %v168 = vadd.f32 %v163, %v166
    %v169 = vtanh.pop %v168
    %v170 = vld [vmem:[#allocation7] sm:$0xff]
    %v171 = vld [vmem:[#allocation7 + $0x8] sm:$0xff]
    %v172 = vld [vmem:[#allocation7 + $0x10] sm:$0xff]
    %v173 = vld [vmem:[#allocation7 + $0x18] sm:$0xff]
    %v174 = vld [vmem:[%s6] sm:$0x1]
    %v176 = vperm.slane %v174, 0
    %v179 = vsel %vm126, %v169, 0
    %181 = vmatpush.msra.mxu0 0.0
    %182 = vmatpush.msra.mxu0 0.0
    %183 = vmatpush.msra.mxu0 0.0
    %184 = vmatpush.msra.mxu0 0.0
    %185 = vmatpush.msra.mxu0 0.0
    %186 = vmatpush.msra.mxu0 0.0
    %187 = vmatpush.msra.mxu0 0.0
    %188 = vmatpush.msra.mxu0 0.0
    %189 = vmatpush.msra.mxu0 0.0
    %190 = vmatpush.msra.mxu0 0.0
    %191 = vmatpush.msra.mxu0 0.0
    %192 = vmatpush.msra.mxu0 0.0
    %193 = vmatpush.msra.mxu0 %v173
    %194 = vmatpush.msra.mxu0 %v172
    %195 = vmatpush.msra.mxu0 %v171
    %196 = vmatpush.msra.mxu0 %v170
    %197 = vmatmul.f32.gmra.mxu0 %v179
    %v198 = vpop.f32.mrf.mxu0
    %v199 = vadd.f32 %v176, %v198
    %200 = vdwg.mxu0
    %v201 = vmax.f32 %v199, 0.0
    %v202 = vld [vmem:[#allocation8] sm:$0xff]
    %v203 = vld [vmem:[#allocation8 + $0x8] sm:$0xff]
    %v204 = vld [vmem:[#allocation8 + $0x10] sm:$0xff]
    %v205 = vld [vmem:[#allocation8 + $0x18] sm:$0xff]
    %v206 = vld [vmem:[%s8] sm:$0x1]
    %v208 = vperm.slane %v206, 0
    %v211 = vsel %vm126, %v201, 0
    %213 = vmatpush.msra.mxu0 0.0
    %214 = vmatpush.msra.mxu0 0.0
    %215 = vmatpush.msra.mxu0 0.0
    %216 = vmatpush.msra.mxu0 0.0
    %217 = vmatpush.msra.mxu0 0.0
    %218 = vmatpush.msra.mxu0 0.0
    %219 = vmatpush.msra.mxu0 0.0
    %220 = vmatpush.msra.mxu0 0.0
    %221 = vmatpush.msra.mxu0 0.0
    %222 = vmatpush.msra.mxu0 0.0
    %223 = vmatpush.msra.mxu0 0.0
    %224 = vmatpush.msra.mxu0 0.0
    %225 = vmatpush.msra.mxu0 %v205
    %226 = vmatpush.msra.mxu0 %v204
    %227 = vmatpush.msra.mxu0 %v203
    %228 = vmatpush.msra.mxu0 %v202
    %229 = vmatmul.f32.gmra.mxu0 %v211
    %v230 = vpop.f32.mrf.mxu0
    %v231 = vadd.f32 %v208, %v230
    %232 = vdwg.mxu0
    %v233 = vtanh.pop %v231
    %234 = vst [vmem:[#allocation10] sm:$0xff] %v233
    // Predicated region
    $region54: #{tpu_custom_call.1} parent=1 // pred_check
      _
    $region55: #{tpu_custom_call.1} parent=1 // pred_check_branch
      %236 = sbr.rel (0) target = $region57
    $region56: #{tpu_custom_call.1} parent=1 // pred_region
      %238 = vsyncadd [#allocation4], 0
      %s240 = sshll.u32 [#allocation10], 4
      %s241 = int_to_ptr.vmem [resolvable:$true] %s240
      %s242 = sshll.u32 %s9, 4
      %s243 = int_to_ptr.hbm [resolvable:$true] %s242
      %245 = dma.vmem_to_hbm [thread:$0]  %s241, 128, %s243, [#allocation4]
    $region57: #{tpu_custom_call.1} parent=1 // pred_fallthru
      _
    // Predicated region
    $region58: #{tpu_custom_call.1} parent=1 // pred_check
      _
    $region59: #{tpu_custom_call.1} parent=1 // pred_check_branch
      %247 = sbr.rel (0) target = $region61
    $region60: #{tpu_custom_call.1} parent=1 // pred_region
      %249 = dma.done [#allocation4], 128
    $region61: #{tpu_custom_call.1} parent=1 // pred_fallthru
      _
    %250 = vsyncpa [#allocation3], 1
    %251 = vsyncpa [#allocation6], 1
    %252 = vsyncpa [#allocation9], 1
    %253 = vsyncpa [#allocation4], 1

</llo_original>
